<compile_context>
chip_gen: v7x
topology: tpu7x:2x2x1
jax: 0.10.0
libtpu: 0.0.40
codegen_flags: <defaults>
</compile_context>

<pallas_src>
import functools

import jax
import jax.numpy as jnp
from jax.experimental import pallas as pl
from jax.experimental.pallas import tpu as pltpu


def _r2r_kernel(y_ref, noise_ref, w1t_ref, b1_ref, w2t_ref, b2_ref, out_ref,
                *, sigma, alpha, mc_samples):
    """Grid = (row_tile i, mc). Output block is resident across the mc axis."""
    mc = pl.program_id(1)

    @pl.when(mc == 0)
    def _init():
        out_ref[...] = jnp.zeros_like(out_ref)

    y = y_ref[...]                       # (C, TILE) f32 (same block reused across mc)
    noise = noise_ref[0]                 # (C, TILE) f32, fresh per mc sample
    y_plus = y + noise * (sigma * alpha)

    # Synthetic "model": per-pixel channel MLP (1x1 conv -> ReLU -> 1x1 conv).
    # TODO(synk): the real deepinv `model(y_plus, physics)` is an arbitrary external
    # denoiser + physics operator with no direct Pallas equivalent; replaced by this MLP.
    h = jnp.maximum(
        jnp.dot(w1t_ref[...], y_plus, preferred_element_type=jnp.float32) + b1_ref[...],
        0.0,
    )
    o = jnp.dot(w2t_ref[...], h, preferred_element_type=jnp.float32) + b2_ref[...]

    out_ref[...] += o

    @pl.when(mc == mc_samples - 1)
    def _finalize():
        out_ref[...] = out_ref[...] * (1.0 / mc_samples)


def r2r_forward(y_nchw, w1, b1, w2, b2, *, sigma, alpha, mc_samples, noise_key,
                tile=512):
    """Eval-mode forward of R2RModel.

    y_nchw: (N, C, H, W) float32
    w1: (C, HIDDEN), b1: (HIDDEN,), w2: (HIDDEN, C), b2: (C,)  -- synthetic denoiser.
    """
    N, C, H, W = y_nchw.shape
    HIDDEN = w1.shape[1]
    R = N * H * W

    # Lane-dense layout: NCHW -> (C, N*H*W), spatial on the lane axis.
    y2d = jnp.transpose(y_nchw, (1, 0, 2, 3)).reshape(C, R).astype(jnp.float32)

    # Pad the spatial axis to a multiple of the lane-dense tile (>= multiple of 128).
    tile = max(128, (tile // 128) * 128)
    num_tiles = pl.cdiv(R, tile)
    r_pad = num_tiles * tile
    if r_pad != R:
        y2d = jnp.pad(y2d, ((0, 0), (0, r_pad - R)))

    # extra_noise ~ N(0, 1); one independent field per MC sample (== torch.randn_like).
    noise = jax.random.normal(noise_key, (mc_samples, C, r_pad), dtype=jnp.float32)

    # Weights laid out so the MLP contracts over the (small) sublane channel dim.
    w1t = jnp.asarray(w1, jnp.float32).T            # (HIDDEN, C)
    b1c = jnp.asarray(b1, jnp.float32).reshape(HIDDEN, 1)
    w2t = jnp.asarray(w2, jnp.float32).T            # (C, HIDDEN)
    b2c = jnp.asarray(b2, jnp.float32).reshape(C, 1)

    kernel = functools.partial(
        _r2r_kernel,
        sigma=float(sigma),
        alpha=float(alpha),
        mc_samples=int(mc_samples),
    )

    out2d = pl.pallas_call(
        kernel,
        out_shape=jax.ShapeDtypeStruct((C, r_pad), jnp.float32),
        grid=(num_tiles, mc_samples),
        in_specs=[
            pl.BlockSpec((C, tile), lambda i, mc: (0, i)),         # y tile (mc-invariant)
            pl.BlockSpec((1, C, tile), lambda i, mc: (mc, 0, i)),  # noise tile per mc
            pl.BlockSpec((HIDDEN, C), lambda i, mc: (0, 0)),       # w1^T
            pl.BlockSpec((HIDDEN, 1), lambda i, mc: (0, 0)),       # b1
            pl.BlockSpec((C, HIDDEN), lambda i, mc: (0, 0)),       # w2^T
            pl.BlockSpec((C, 1), lambda i, mc: (0, 0)),            # b2
        ],
        out_specs=pl.BlockSpec((C, tile), lambda i, mc: (0, i)),   # resident across mc
        compiler_params=pltpu.CompilerParams(
            dimension_semantics=("parallel", "arbitrary"),
        ),
    )(y2d, noise, w1t, b1c, w2t, b2c)

    # (C, N*H*W) -> NCHW
    out = out2d[:, :R].reshape(C, N, H, W).transpose(1, 0, 2, 3)
    return out


if __name__ == "__main__":
    # Small shapes consistent with the module's forward: NCHW image batch.
    N, C, H, W = 2, 4, 16, 16
    HIDDEN = 32
    SIGMA = 0.1
    ALPHA = 0.5
    MC_SAMPLES = 5  # eval mode (self.training == False)

    key = jax.random.PRNGKey(0)
    k_y, k_w1, k_b1, k_w2, k_b2, k_noise = jax.random.split(key, 6)

    y = jax.random.uniform(k_y, (N, C, H, W), dtype=jnp.float32)

    # Deterministic synthetic "model" parameters (2-layer channel MLP).
    w1 = jax.random.normal(k_w1, (C, HIDDEN), dtype=jnp.float32) * 0.1
    b1 = jax.random.normal(k_b1, (HIDDEN,), dtype=jnp.float32) * 0.01
    w2 = jax.random.normal(k_w2, (HIDDEN, C), dtype=jnp.float32) * 0.1
    b2 = jax.random.normal(k_b2, (C,), dtype=jnp.float32) * 0.01

    out = r2r_forward(
        y, w1, b1, w2, b2,
        sigma=SIGMA, alpha=ALPHA, mc_samples=MC_SAMPLES, noise_key=k_noise,
    )
    out = jax.block_until_ready(out)

    assert out.shape == (N, C, H, W)
    assert bool(jnp.all(jnp.isfinite(out)))
    print("KERNEL_OK")
</pallas_src>

<mosaic_0001>
module attributes {stable_mosaic.version = 11 : i64} {
  func.func @_r2r_kernel(%arg0: i32, %arg1: i32, %arg2: memref<4x512xf32, #tpu.memory_space<vmem>>, %arg3: memref<1x4x512xf32, #tpu.memory_space<vmem>>, %arg4: memref<32x4xf32, #tpu.memory_space<vmem>>, %arg5: memref<32x1xf32, #tpu.memory_space<vmem>>, %arg6: memref<4x32xf32, #tpu.memory_space<vmem>>, %arg7: memref<4x1xf32, #tpu.memory_space<vmem>>, %arg8: memref<4x512xf32, #tpu.memory_space<vmem>>) attributes {dimension_semantics = [#tpu.dimension_semantics<parallel>, #tpu.dimension_semantics<arbitrary>], iteration_bounds = array<i64: 1, 5>, scalar_prefetch = 0 : i64, scratch_operands = 0 : i64, tpu.core_type = #tpu.core_type<tc>, window_params = [{transform_indices = @transform_0, window_bounds = array<i64: 4, 512>}, {transform_indices = @transform_1, window_bounds = array<i64: 1, 4, 512>}, {pipeline_mode = #tpu.pipeline_mode<synchronous>, transform_indices = @transform_2, window_bounds = array<i64: 32, 4>}, {pipeline_mode = #tpu.pipeline_mode<synchronous>, transform_indices = @transform_3, window_bounds = array<i64: 32, 1>}, {pipeline_mode = #tpu.pipeline_mode<synchronous>, transform_indices = @transform_4, window_bounds = array<i64: 4, 32>}, {pipeline_mode = #tpu.pipeline_mode<synchronous>, transform_indices = @transform_5, window_bounds = array<i64: 4, 1>}, {transform_indices = @transform_6, window_bounds = array<i64: 4, 512>}]} {
    %c0_i32 = arith.constant 0 : i32
    %0 = arith.cmpi eq, %arg1, %c0_i32 : i32
    %1 = arith.extui %0 : i1 to i32
    %c0_i32_0 = arith.constant 0 : i32
    %2 = arith.cmpi ne, %1, %c0_i32_0 : i32
    scf.if %2 {
      %cst_21 = arith.constant 0.000000e+00 : f32
      %27 = vector.broadcast %cst_21 : f32 to vector<4x512xf32>
      %c0_22 = arith.constant 0 : index
      %c0_23 = arith.constant 0 : index
      %28 = vector.load %arg8[%c0_22, %c0_23] : memref<4x512xf32, #tpu.memory_space<vmem>>, vector<4x512xf32>
      tpu.vector_store %arg8[%c0_22, %c0_23], %27 {strides = array<i32>} : memref<4x512xf32, #tpu.memory_space<vmem>>, vector<4x512xf32>,
    } else {
    }
    %c0 = arith.constant 0 : index
    %c0_1 = arith.constant 0 : index
    %3 = vector.load %arg2[%c0, %c0_1] : memref<4x512xf32, #tpu.memory_space<vmem>>, vector<4x512xf32>
    %c0_2 = arith.constant 0 : index
    %c0_3 = arith.constant 0 : index
    %c0_4 = arith.constant 0 : index
    %4 = vector.load %arg3[%c0_2, %c0_3, %c0_4] : memref<1x4x512xf32, #tpu.memory_space<vmem>>, vector<1x4x512xf32>
    %5 = vector.shape_cast %4 : vector<1x4x512xf32> to vector<4x512xf32>
    %cst = arith.constant 5.000000e-02 : f32
    %6 = vector.broadcast %cst : f32 to vector<4x512xf32>
    %7 = arith.mulf %5, %6 : vector<4x512xf32>
    %8 = arith.addf %3, %7 : vector<4x512xf32>
    %c0_5 = arith.constant 0 : index
    %c0_6 = arith.constant 0 : index
    %9 = vector.load %arg4[%c0_5, %c0_6] : memref<32x4xf32, #tpu.memory_space<vmem>>, vector<32x4xf32>
    %cst_7 = arith.constant dense<0.000000e+00> : vector<32x512xf32>
    %10 = tpu.matmul %9, %8, %cst_7 {dimension_numbers = #tpu.dot_dimension_numbers<[1], [0], [0], [1], [0, 0, 1, 1], [], []>} : vector<32x4xf32>, vector<4x512xf32>, vector<32x512xf32> -> vector<32x512xf32>
    %c0_8 = arith.constant 0 : index
    %c0_9 = arith.constant 0 : index
    %11 = vector.load %arg5[%c0_8, %c0_9] : memref<32x1xf32, #tpu.memory_space<vmem>>, vector<32x1xf32>
    %12 = vector.broadcast %11 : vector<32x1xf32> to vector<32x512xf32>
    %13 = arith.addf %10, %12 : vector<32x512xf32>
    %cst_10 = arith.constant 0.000000e+00 : f32
    %14 = vector.broadcast %cst_10 : f32 to vector<32x512xf32>
    %15 = arith.maximumf %13, %14 : vector<32x512xf32>
    %c0_11 = arith.constant 0 : index
    %c0_12 = arith.constant 0 : index
    %16 = vector.load %arg6[%c0_11, %c0_12] : memref<4x32xf32, #tpu.memory_space<vmem>>, vector<4x32xf32>
    %cst_13 = arith.constant dense<0.000000e+00> : vector<4x512xf32>
    %17 = tpu.matmul %16, %15, %cst_13 {dimension_numbers = #tpu.dot_dimension_numbers<[1], [0], [0], [1], [0, 0, 1, 1], [], []>} : vector<4x32xf32>, vector<32x512xf32>, vector<4x512xf32> -> vector<4x512xf32>
    %c0_14 = arith.constant 0 : index
    %c0_15 = arith.constant 0 : index
    %18 = vector.load %arg7[%c0_14, %c0_15] : memref<4x1xf32, #tpu.memory_space<vmem>>, vector<4x1xf32>
    %19 = vector.broadcast %18 : vector<4x1xf32> to vector<4x512xf32>
    %20 = arith.addf %17, %19 : vector<4x512xf32>
    %c0_16 = arith.constant 0 : index
    %c0_17 = arith.constant 0 : index
    %21 = vector.load %arg8[%c0_16, %c0_17] : memref<4x512xf32, #tpu.memory_space<vmem>>, vector<4x512xf32>
    %22 = arith.addf %21, %20 : vector<4x512xf32>
    %c0_18 = arith.constant 0 : index
    %c0_19 = arith.constant 0 : index
    %23 = vector.load %arg8[%c0_18, %c0_19] : memref<4x512xf32, #tpu.memory_space<vmem>>, vector<4x512xf32>
    tpu.vector_store %arg8[%c0_18, %c0_19], %22 {strides = array<i32>} : memref<4x512xf32, #tpu.memory_space<vmem>>, vector<4x512xf32>,
    %c4_i32 = arith.constant 4 : i32
    %24 = arith.cmpi eq, %arg1, %c4_i32 : i32
    %25 = arith.extui %24 : i1 to i32
    %c0_i32_20 = arith.constant 0 : i32
    %26 = arith.cmpi ne, %25, %c0_i32_20 : i32
    scf.if %26 {
      %c0_21 = arith.constant 0 : index
      %c0_22 = arith.constant 0 : index
      %27 = vector.load %arg8[%c0_21, %c0_22] : memref<4x512xf32, #tpu.memory_space<vmem>>, vector<4x512xf32>
      %cst_23 = arith.constant 2.000000e-01 : f32
      %28 = vector.broadcast %cst_23 : f32 to vector<4x512xf32>
      %29 = arith.mulf %27, %28 : vector<4x512xf32>
      %c0_24 = arith.constant 0 : index
      %c0_25 = arith.constant 0 : index
      %30 = vector.load %arg8[%c0_24, %c0_25] : memref<4x512xf32, #tpu.memory_space<vmem>>, vector<4x512xf32>
      tpu.vector_store %arg8[%c0_24, %c0_25], %29 {strides = array<i32>} : memref<4x512xf32, #tpu.memory_space<vmem>>, vector<4x512xf32>,
    } else {
    }
    return
  }
  func.func @transform_0(%arg0: i32, %arg1: i32) -> (i32, i32) {
    %c0_i32 = arith.constant 0 : i32
    %c0_i32_0 = arith.constant 0 : i32
    return %c0_i32, %arg0 : i32, i32
  }
  func.func @transform_1(%arg0: i32, %arg1: i32) -> (i32, i32, i32) {
    %c0_i32 = arith.constant 0 : i32
    %c0_i32_0 = arith.constant 0 : i32
    return %arg1, %c0_i32, %arg0 : i32, i32, i32
  }
  func.func @transform_2(%arg0: i32, %arg1: i32) -> (i32, i32) {
    %c0_i32 = arith.constant 0 : i32
    %c0_i32_0 = arith.constant 0 : i32
    %c0_i32_1 = arith.constant 0 : i32
    return %c0_i32, %c0_i32_0 : i32, i32
  }
  func.func @transform_3(%arg0: i32, %arg1: i32) -> (i32, i32) {
    %c0_i32 = arith.constant 0 : i32
    %c0_i32_0 = arith.constant 0 : i32
    %c0_i32_1 = arith.constant 0 : i32
    return %c0_i32, %c0_i32_0 : i32, i32
  }
  func.func @transform_4(%arg0: i32, %arg1: i32) -> (i32, i32) {
    %c0_i32 = arith.constant 0 : i32
    %c0_i32_0 = arith.constant 0 : i32
    %c0_i32_1 = arith.constant 0 : i32
    return %c0_i32, %c0_i32_0 : i32, i32
  }
  func.func @transform_5(%arg0: i32, %arg1: i32) -> (i32, i32) {
    %c0_i32 = arith.constant 0 : i32
    %c0_i32_0 = arith.constant 0 : i32
    %c0_i32_1 = arith.constant 0 : i32
    return %c0_i32, %c0_i32_0 : i32, i32
  }
  func.func @transform_6(%arg0: i32, %arg1: i32) -> (i32, i32) {
    %c0_i32 = arith.constant 0 : i32
    %c0_i32_0 = arith.constant 0 : i32
    return %c0_i32, %arg0 : i32, i32
  }
}

</mosaic_0001>

<llo_original>
// kernel: tpu_custom_call.1
$region0: #{tpu_custom_call.1}
  #allocation0 [shape = 'u32[]', space=smem, size = 0x4, offset = 0x4, fixed_abs, tag = 'smem constant byte address 0x4 - core index']
  #allocation1 [shape = 'u32[144,128]{1,0:T(1,128)}', space=vmem, size = 0x12000, scoped, tag = 'internal scratch']
  %s0 = inlined_call_operand.vmem [shape: f32[4,512], index: 0, kind: input, shape index: {}]
  %s1 = inlined_call_operand.hbm [shape: f32[5,4,512], index: 1, kind: input, shape index: {}]
  %s2 = inlined_call_operand.vmem [shape: f32[32,4], index: 2, kind: input, shape index: {}]
  %s3 = inlined_call_operand.vmem [shape: f32[32,1], index: 3, kind: input, shape index: {}]
  %s4 = inlined_call_operand.vmem [shape: f32[4,32], index: 4, kind: input, shape index: {}]
  %s5 = inlined_call_operand.vmem [shape: f32[4,1], index: 5, kind: input, shape index: {}]
  %s6 = inlined_call_operand.hbm [shape: f32[4,512], index: 6, kind: output, shape index: {}]
  %s7 = sld [smem:[#allocation0]]
  $region69: #{tpu_custom_call.1} parent=0
    _
  %s9 = ssub.s32 1, %s7
  %s10 = scalar_select 0, %s9, %s7
  $region1: #{tpu_custom_call.1} parent=0
    #allocation2 [shape = 'u8[16384]{0}', space=vmem, size = 0x4000, scoped, tag = 'input window, operand 1']
    #allocation3 [shape = 's32[2]{0}', space=sflag, size = 0x8, scoped, tag = 'scoped memory for tpu_custom_call.1']
    #allocation4 [shape = 's32[2]{0}', space=sflag, size = 0x8, scoped, tag = 'scoped memory for tpu_custom_call.1']
    #allocation5 [shape = 'u8[8192]{0}', space=vmem, size = 0x2000, scoped, tag = 'output window, operand 0, single buffered']
    %11 = vsyncpa [#allocation3], 0
    %s12 = scalar_lea.sflag [#allocation3], 1
    %13 = vsyncpa %s12, 0
    %14 = vsyncpa [#allocation4], 0
    loop: start=0, step=1, limit=7
    $region2: #{tpu_custom_call.1} parent=1 // loop_pre_header
      _
    $region3: #{tpu_custom_call.1} parent=1 // loop_header
      %s16 = sphi 0, %s20
      %p17 = scmp.ge.s32.totalorder %s16, 7
      %s23 = sphi 0, %s35
      %s24 = sphi 0, %s31
      %s25 = sphi 0, %s23
      %s26 = sphi 0, %s24
      %s27 = sphi 0, %s25
      %s28 = sphi 0, %s26
      %s38 = sphi 0, %s40
      %s41 = sphi 0, %s38
      %s42 = sphi 0, %s41
      %s58 = sphi 0, %s42
      %s66 = sphi 0, %s68
      %s69 = sphi 0, %s66
      %s70 = sphi 0, %s69
      %s86 = sphi 0, %s70
      %s90 = sphi 0, %s90
      %s92 = sphi 0, %s90
      %s93 = sphi 0, %s92
      %s107 = sphi 0, %s93
      %s111 = sphi 0, %s111
      %s113 = sphi 0, %s111
      %s114 = sphi 0, %s113
      %s128 = sphi 0, %s114
      %s132 = sphi 0, %s132
      %s134 = sphi 0, %s132
      %s135 = sphi 0, %s134
      %s149 = sphi 0, %s135
      %s153 = sphi 0, %s153
      %s155 = sphi 0, %s153
      %s156 = sphi 0, %s155
      %s170 = sphi 0, %s156
      %s176 = sphi 0, %s178
      %s179 = sphi 0, %s176
      %s180 = sphi 0, %s179
      %s196 = sphi 0, %s180
    $region4: #{tpu_custom_call.1} parent=1 // loop_header_branch
      %19 = sbr.rel (%p17) target = $region8
    $region5: #{tpu_custom_call.1} parent=1 // loop_body
      %s21 = ssub.s32 %s16, 1
      %s22 = ssub.s32 %s16, 2
      %s29 = sadd.s32 1, %s24
      %p30 = scmp.ge.s32.totalorder %s29, 5
      %s31 = scalar_select %p30, 0, %s29
      %s32 = sadd.s32 1, %s23
      %s33 = scalar_select %p30, %s32, %s23
      %p34 = scmp.ge.s32.totalorder %s33, 1
      %s35 = scalar_select %p34, 0, %s33
      %s36 = ssub.s32 %s23, %s35
      %p37 = scmp.eq.s32.totalorder %s36, 0
      %s39 = sadd.s32 %s38, 1
      %s40 = scalar_select %p37, %s38, %s39
      %p43 = pneg %p37
      %p44 = scmp.eq.s32.totalorder %s16, 4
      %p45 = por %p43, %p44
      %p46 = scmp.ne.s32.totalorder %s38, %s41
      %p47 = scmp.eq.s32.totalorder %s16, 0
      %p48 = por %p46, %p47
      %p49 = scmp.ne.s32.totalorder %s38, %s41
      %p50 = scmp.eq.s32.totalorder %s21, 4
      %p51 = por %p49, %p50
      %p52 = scmp.ne.s32.totalorder %s41, %s42
      %p53 = scmp.eq.s32.totalorder %s21, 0
      %p54 = por %p52, %p53
      %p55 = scmp.ne.s32.totalorder %s41, %s42
      %p56 = scmp.eq.s32.totalorder %s22, 4
      %p57 = por %p55, %p56
      %p59 = scmp.ne.s32.totalorder %s42, %s58
      %p60 = scmp.eq.s32.totalorder %s22, 0
      %p61 = por %p59, %p60
      %s62 = ssub.s32 %s24, %s31
      %s63 = ssub.s32 %s23, %s35
      %s64 = sor.u32 %s62, %s63
      %p65 = scmp.eq.s32.totalorder %s64, 0
      %s67 = sadd.s32 %s66, 1
      %s68 = scalar_select %p65, %s66, %s67
      %p71 = pneg %p65
      %p72 = scmp.eq.s32.totalorder %s16, 4
      %p73 = por %p71, %p72
      %p74 = scmp.ne.s32.totalorder %s66, %s69
      %p75 = scmp.eq.s32.totalorder %s16, 0
      %p76 = por %p74, %p75
      %p77 = scmp.ne.s32.totalorder %s66, %s69
      %p78 = scmp.eq.s32.totalorder %s21, 4
      %p79 = por %p77, %p78
      %p80 = scmp.ne.s32.totalorder %s69, %s70
      %p81 = scmp.eq.s32.totalorder %s21, 0
      %p82 = por %p80, %p81
      %p83 = scmp.ne.s32.totalorder %s69, %s70
      %p84 = scmp.eq.s32.totalorder %s22, 4
      %p85 = por %p83, %p84
      %p87 = scmp.ne.s32.totalorder %s70, %s86
      %p88 = scmp.eq.s32.totalorder %s22, 0
      %p89 = por %p87, %p88
      %s91 = sadd.s32 %s90, 1
      %p94 = scmp.eq.s32.totalorder %s16, 4
      %p95 = scmp.ne.s32.totalorder %s90, %s92
      %p96 = scmp.eq.s32.totalorder %s16, 0
      %p97 = por %p95, %p96
      %p98 = scmp.ne.s32.totalorder %s90, %s92
      %p99 = scmp.eq.s32.totalorder %s21, 4
      %p100 = por %p98, %p99
      %p101 = scmp.ne.s32.totalorder %s92, %s93
      %p102 = scmp.eq.s32.totalorder %s21, 0
      %p103 = por %p101, %p102
      %p104 = scmp.ne.s32.totalorder %s92, %s93
      %p105 = scmp.eq.s32.totalorder %s22, 4
      %p106 = por %p104, %p105
      %p108 = scmp.ne.s32.totalorder %s93, %s107
      %p109 = scmp.eq.s32.totalorder %s22, 0
      %p110 = por %p108, %p109
      %s112 = sadd.s32 %s111, 1
      %p115 = scmp.eq.s32.totalorder %s16, 4
      %p116 = scmp.ne.s32.totalorder %s111, %s113
      %p117 = scmp.eq.s32.totalorder %s16, 0
      %p118 = por %p116, %p117
      %p119 = scmp.ne.s32.totalorder %s111, %s113
      %p120 = scmp.eq.s32.totalorder %s21, 4
      %p121 = por %p119, %p120
      %p122 = scmp.ne.s32.totalorder %s113, %s114
      %p123 = scmp.eq.s32.totalorder %s21, 0
      %p124 = por %p122, %p123
      %p125 = scmp.ne.s32.totalorder %s113, %s114
      %p126 = scmp.eq.s32.totalorder %s22, 4
      %p127 = por %p125, %p126
      %p129 = scmp.ne.s32.totalorder %s114, %s128
      %p130 = scmp.eq.s32.totalorder %s22, 0
      %p131 = por %p129, %p130
      %s133 = sadd.s32 %s132, 1
      %p136 = scmp.eq.s32.totalorder %s16, 4
      %p137 = scmp.ne.s32.totalorder %s132, %s134
      %p138 = scmp.eq.s32.totalorder %s16, 0
      %p139 = por %p137, %p138
      %p140 = scmp.ne.s32.totalorder %s132, %s134
      %p141 = scmp.eq.s32.totalorder %s21, 4
      %p142 = por %p140, %p141
      %p143 = scmp.ne.s32.totalorder %s134, %s135
      %p144 = scmp.eq.s32.totalorder %s21, 0
      %p145 = por %p143, %p144
      %p146 = scmp.ne.s32.totalorder %s134, %s135
      %p147 = scmp.eq.s32.totalorder %s22, 4
      %p148 = por %p146, %p147
      %p150 = scmp.ne.s32.totalorder %s135, %s149
      %p151 = scmp.eq.s32.totalorder %s22, 0
      %p152 = por %p150, %p151
      %s154 = sadd.s32 %s153, 1
      %p157 = scmp.eq.s32.totalorder %s16, 4
      %p158 = scmp.ne.s32.totalorder %s153, %s155
      %p159 = scmp.eq.s32.totalorder %s16, 0
      %p160 = por %p158, %p159
      %p161 = scmp.ne.s32.totalorder %s153, %s155
      %p162 = scmp.eq.s32.totalorder %s21, 4
      %p163 = por %p161, %p162
      %p164 = scmp.ne.s32.totalorder %s155, %s156
      %p165 = scmp.eq.s32.totalorder %s21, 0
      %p166 = por %p164, %p165
      %p167 = scmp.ne.s32.totalorder %s155, %s156
      %p168 = scmp.eq.s32.totalorder %s22, 4
      %p169 = por %p167, %p168
      %p171 = scmp.ne.s32.totalorder %s156, %s170
      %p172 = scmp.eq.s32.totalorder %s22, 0
      %p173 = por %p171, %p172
      %s174 = ssub.s32 %s23, %s35
      %p175 = scmp.eq.s32.totalorder %s174, 0
      %s177 = sadd.s32 %s176, 1
      %s178 = scalar_select %p175, %s176, %s177
      %p181 = pneg %p175
      %p182 = scmp.eq.s32.totalorder %s16, 4
      %p183 = por %p181, %p182
      %p184 = scmp.ne.s32.totalorder %s176, %s179
      %p185 = scmp.eq.s32.totalorder %s16, 0
      %p186 = por %p184, %p185
      %p187 = scmp.ne.s32.totalorder %s176, %s179
      %p188 = scmp.eq.s32.totalorder %s21, 4
      %p189 = por %p187, %p188
      %p190 = scmp.ne.s32.totalorder %s179, %s180
      %p191 = scmp.eq.s32.totalorder %s21, 0
      %p192 = por %p190, %p191
      %p193 = scmp.ne.s32.totalorder %s179, %s180
      %p194 = scmp.eq.s32.totalorder %s22, 4
      %p195 = por %p193, %p194
      %p197 = scmp.ne.s32.totalorder %s180, %s196
      %p198 = scmp.eq.s32.totalorder %s22, 0
      %p199 = por %p197, %p198
      %p200 = scmp.le.s32.totalorder 1, %s16
      %p201 = scmp.lt.s32.totalorder %s16, 6
      %p202 = pnand %p200, %p201
      %p203 = pneg %p202
      // Predicated region
      $region9: #{tpu_custom_call.1} parent=5 // pred_check
        _
      $region10: #{tpu_custom_call.1} parent=5 // pred_check_branch
        %205 = sbr.rel (%p202) target = $region12
      $region11: #{tpu_custom_call.1} parent=5 // pred_region
        %s206 = ssub.s32 %s16, 1
        // Predicated region
        $region13: #{tpu_custom_call.1} parent=11 // pred_check
          %p207 = pneg %p54
        $region14: #{tpu_custom_call.1} parent=11 // pred_check_branch
          %209 = sbr.rel (%p207) target = $region16
        $region15: #{tpu_custom_call.1} parent=11 // pred_region
          %s210 = smul.u32 4, %s25
          %p211 = scmp.lt.s32.totalorder %s210, 3
          %s212 = scalar_select %p211, %s210, 3
          %s213 = smul.addr %s212, 4
          %s214 = scalar_lea.vmem %s0, %s213
          %s215 = smul.u32 4, %s25
        $region16: #{tpu_custom_call.1} parent=11 // pred_fallthru
          _
        // Predicated region
        $region17: #{tpu_custom_call.1} parent=11 // pred_check
          %p216 = pneg %p103
        $region18: #{tpu_custom_call.1} parent=11 // pred_check_branch
          %218 = sbr.rel (%p216) target = $region20
        $region19: #{tpu_custom_call.1} parent=11 // pred_region
          _
        $region20: #{tpu_custom_call.1} parent=11 // pred_fallthru
          _
        // Predicated region
        $region21: #{tpu_custom_call.1} parent=11 // pred_check
          %p219 = pneg %p124
        $region22: #{tpu_custom_call.1} parent=11 // pred_check_branch
          %221 = sbr.rel (%p219) target = $region24
        $region23: #{tpu_custom_call.1} parent=11 // pred_region
          _
        $region24: #{tpu_custom_call.1} parent=11 // pred_fallthru
          _
        // Predicated region
        $region25: #{tpu_custom_call.1} parent=11 // pred_check
          %p222 = pneg %p145
        $region26: #{tpu_custom_call.1} parent=11 // pred_check_branch
          %224 = sbr.rel (%p222) target = $region28
        $region27: #{tpu_custom_call.1} parent=11 // pred_region
          _
        $region28: #{tpu_custom_call.1} parent=11 // pred_fallthru
          _
        // Predicated region
        $region29: #{tpu_custom_call.1} parent=11 // pred_check
          %p225 = pneg %p166
        $region30: #{tpu_custom_call.1} parent=11 // pred_check_branch
          %227 = sbr.rel (%p225) target = $region32
        $region31: #{tpu_custom_call.1} parent=11 // pred_region
          _
        $region32: #{tpu_custom_call.1} parent=11 // pred_fallthru
          _
      $region12: #{tpu_custom_call.1} parent=5 // pred_fallthru
        _
      %p228 = scmp.lt.s32.totalorder %s16, 5
      // Predicated region
      $region33: #{tpu_custom_call.1} parent=5 // pred_check
        %p229 = pneg %p228
      $region34: #{tpu_custom_call.1} parent=5 // pred_check_branch
        %231 = sbr.rel (%p229) target = $region36
      $region35: #{tpu_custom_call.1} parent=5 // pred_region
        // Predicated region
        $region37: #{tpu_custom_call.1} parent=35 // pred_check
          %p232 = pneg %p76
        $region38: #{tpu_custom_call.1} parent=35 // pred_check_branch
          %234 = sbr.rel (%p232) target = $region40
        $region39: #{tpu_custom_call.1} parent=35 // pred_region
          %s235 = sand.u32 %s66, 1
          %s236 = scalar_lea.sflag [#allocation3], %s235
          %s237 = sand.u32 %s66, 1
          %s238 = smul.addr %s237, 16
          %s239 = scalar_lea.vmem [#allocation2], %s238
          %s240 = smul.u32 4, %s23
          %s242 = ssub.s32 256, 256
          %243 = vsyncadd %s236, %s242
          %s244 = smul.addr %s24, 4
          %s245 = sadd.s32 %s240, %s244
          %s246 = smul.addr %s245, 64
          %s247 = scalar_lea.hbm %s1, %s246
          %s249 = sshll.u32 %s239, 4
          %s250 = int_to_ptr.vmem [resolvable:$true] %s249
          %252 = dma.hbm_to_vmem [thread:$0]  %s247, 256, %s250, %s236
        $region40: #{tpu_custom_call.1} parent=35 // pred_fallthru
          _
      $region36: #{tpu_custom_call.1} parent=5 // pred_fallthru
        _
      %p253 = scmp.le.s32.totalorder 1, %s16
      %p254 = scmp.lt.s32.totalorder %s16, 6
      %p255 = pnand %p253, %p254
      %p256 = pneg %p255
      // Predicated region
      $region41: #{tpu_custom_call.1} parent=5 // pred_check
        _
      $region42: #{tpu_custom_call.1} parent=5 // pred_check_branch
        %258 = sbr.rel (%p255) target = $region44
      $region43: #{tpu_custom_call.1} parent=5 // pred_region
        %s259 = ssub.s32 %s16, 1
        %s260 = sand.u32 %s69, 1
        %s261 = scalar_lea.sflag [#allocation3], %s260
        %s262 = sand.u32 %s69, 1
        %s263 = smul.addr %s262, 16
        %s264 = scalar_lea.vmem [#allocation2], %s263
        // Predicated region
        $region45: #{tpu_custom_call.1} parent=43 // pred_check
          %p265 = pneg %p82
        $region46: #{tpu_custom_call.1} parent=43 // pred_check_branch
          %267 = sbr.rel (%p265) target = $region48
        $region47: #{tpu_custom_call.1} parent=43 // pred_region
          %268 = dma.done %s261, 256
        $region48: #{tpu_custom_call.1} parent=43 // pred_fallthru
          _
        %s269 = smul.u32 4, %s25
        %p270 = scmp.lt.s32.totalorder %s269, 3
        %s271 = scalar_select %p270, %s269, 3
        %s272 = smul.addr %s271, 4
        %s273 = scalar_lea.vmem %s0, %s272
        %p274 = pneg %p54
        %p275 = pneg %p51
        %s276 = sand.u32 %s69, 1
        %s277 = scalar_lea.sflag [#allocation3], %s276
        %s278 = sand.u32 %s69, 1
        %s279 = smul.addr %s278, 16
        %s280 = scalar_lea.vmem [#allocation2], %s279
        %p281 = pneg %p82
        %p282 = pneg %p79
        %p283 = pneg %p103
        %p284 = pneg %p100
        %p285 = pneg %p124
        %p286 = pneg %p121
        %p287 = pneg %p145
        %p288 = pneg %p142
        %p289 = pneg %p166
        %p290 = pneg %p163
        %p291 = pneg %p192
        %p292 = pneg %p189
        %s293 = smul.u32 4, %s25
        %p294 = scmp.lt.s32.totalorder %s293, 3
        %s295 = scalar_select %p294, %s293, 3
        %s296 = smul.addr %s295, 4
        %s297 = scalar_lea.vmem %s0, %s296
        %s298 = smul.u32 4, %s25
        %s299 = smul.u32 4, %s25
        %s300 = smul.u32 4, %s25
        %p301 = scmp.eq.s32.totalorder %s26, 0
        // Predicated region
        $region49: #{tpu_custom_call.1} parent=43 // pred_check
          %p302 = pneg %p301
        $region50: #{tpu_custom_call.1} parent=43 // pred_check_branch
          %304 = sbr.rel (%p302) target = $region52
        $region51: #{tpu_custom_call.1} parent=43 // pred_region
          %305 = vst [vmem:[#allocation5] sm:$0xff] 0.0
          %306 = vst [vmem:[#allocation5 + $0x8] sm:$0xff] 0.0
        $region52: #{tpu_custom_call.1} parent=43 // pred_fallthru
          _
        %v307 = vld [vmem:[%s297] sm:$0xff]
        %v308 = vld [vmem:[%s297 + $0x8] sm:$0xff]
        %v309 = vld [vmem:[%s264] sm:$0xff]
        %v310 = vld [vmem:[%s264 + $0x8] sm:$0xff]
        %v311 = vmul.f32 %v309, 0.05
        %v312 = vmul.f32 %v310, 0.05
        %v313 = vadd.f32 %v307, %v311
        %v314 = vadd.f32 %v308, %v312
        %v315 = vld [vmem:[%s2] sm:$0xff]
        %v316 = vld [vmem:[%s2 + $0x8] sm:$0xff]
        %v317 = vld [vmem:[%s2 + $0x10] sm:$0xff]
        %v318 = vld [vmem:[%s2 + $0x18] sm:$0xff]
        %v319 = vld [vmem:[%s3] sm:$0xff]
        %v320 = vld [vmem:[%s3 + $0x8] sm:$0xff]
        %v321 = vld [vmem:[%s3 + $0x10] sm:$0xff]
        %v322 = vld [vmem:[%s3 + $0x18] sm:$0xff]
        %324 = vset.pattern.permute.xlu0 0
        %325 = vperm.xlu0 %324, %v319
        %v326 = vpop.permute.xlu0 %325
        %329 = vset.pattern.permute.xlu0 0
        %330 = vperm.xlu0 %329, %v320
        %v331 = vpop.permute.xlu0 %330
        %334 = vset.pattern.permute.xlu0 0
        %335 = vperm.xlu0 %334, %v321
        %v336 = vpop.permute.xlu0 %335
        %339 = vset.pattern.permute.xlu0 0
        %340 = vperm.xlu0 %339, %v322
        %v341 = vpop.permute.xlu0 %340
        %v345 = vcombine.high %v313, %v313
        %v346 = vcombine.high %v314, %v314
        %vm347 = vcmask 31744
        %v349 = vsel %vm347, %v315, 0
        %v352 = vsel %vm347, %v316, 0
        %v355 = vsel %vm347, %v317, 0
        %v358 = vsel %vm347, %v318, 0
        %vm360 = vcmask 1043456
        %v361 = vsel %vm360, %v313, 0
        %v363 = vsel %vm360, %v345, 0
        %v365 = vsel %vm360, %v314, 0
        %v367 = vsel %vm360, %v346, 0
        %369 = vmatprep.subr.mxu0 %v363
        %370 = vmatpush1.msra.mxu0 %v361
        %371 = vmatprep.subr.mxu0 0.0
        %372 = vmatpush1.msra.mxu0 0.0
        %373 = vmatprep.subr.mxu0 0.0
        %374 = vmatpush1.msra.mxu0 0.0
        %375 = vmatprep.subr.mxu0 0.0
        %376 = vmatpush1.msra.mxu0 0.0
        %377 = vmatprep.subr.mxu0 0.0
        %378 = vmatpush1.msra.mxu0 0.0
        %379 = vmatprep.subr.mxu0 0.0
        %380 = vmatpush1.msra.mxu0 0.0
        %381 = vmatprep.subr.mxu0 0.0
        %382 = vmatpush1.msra.mxu0 0.0
        %383 = vmatprep.subr.mxu0 0.0
        %384 = vmatpush1.msra.mxu0 0.0
        %385 = vmatprep.subr.mxu0 0.0
        %386 = vmatpush1.msra.mxu0 0.0
        %387 = vmatprep.subr.mxu0 0.0
        %388 = vmatpush1.msra.mxu0 0.0
        %389 = vmatprep.subr.mxu0 0.0
        %390 = vmatpush1.msra.mxu0 0.0
        %391 = vmatprep.subr.mxu0 0.0
        %392 = vmatpush1.msra.mxu0 0.0
        %393 = vmatprep.subr.mxu0 0.0
        %394 = vmatpush1.msra.mxu0 0.0
        %395 = vmatprep.subr.mxu0 0.0
        %396 = vmatpush1.msra.mxu0 0.0
        %397 = vmatprep.subr.mxu0 0.0
        %398 = vmatpush1.msra.mxu0 0.0
        %399 = vmatprep.subr.mxu0 0.0
        %400 = vmatpush1.msra.mxu0 0.0
        %401 = vmatprep.subr.mxu0 0.0
        %402 = vmatpush1.msra.mxu0 0.0
        %403 = vmatprep.subr.mxu0 0.0
        %404 = vmatpush1.msra.mxu0 0.0
        %405 = vmatprep.subr.mxu0 0.0
        %406 = vmatpush1.msra.mxu0 0.0
        %407 = vmatprep.subr.mxu0 0.0
        %408 = vmatpush1.msra.mxu0 0.0
        %409 = vmatprep.subr.mxu0 0.0
        %410 = vmatpush1.msra.mxu0 0.0
        %411 = vmatprep.subr.mxu0 0.0
        %412 = vmatpush1.msra.mxu0 0.0
        %413 = vmatprep.subr.mxu0 0.0
        %414 = vmatpush1.msra.mxu0 0.0
        %415 = vmatprep.subr.mxu0 0.0
        %416 = vmatpush1.msra.mxu0 0.0
        %417 = vmatprep.subr.mxu0 0.0
        %418 = vmatpush1.msra.mxu0 0.0
        %419 = vmatprep.subr.mxu0 0.0
        %420 = vmatpush1.msra.mxu0 0.0
        %421 = vmatprep.subr.mxu0 0.0
        %422 = vmatpush1.msra.mxu0 0.0
        %423 = vmatprep.subr.mxu0 0.0
        %424 = vmatpush1.msra.mxu0 0.0
        %425 = vmatprep.subr.mxu0 0.0
        %426 = vmatpush1.msra.mxu0 0.0
        %427 = vmatprep.subr.mxu0 0.0
        %428 = vmatpush1.msra.mxu0 0.0
        %429 = vmatprep.subr.mxu0 0.0
        %430 = vmatpush1.msra.mxu0 0.0
        %431 = vmatprep.subr.mxu0 0.0
        %432 = vmatpush1.msra.mxu0 0.0
        %433 = vmatprep.mubr.f32.mxu0 0.0
        %434 = vmatmul.mubr.f32.gmra.mrb[0].mxu0 %v349
        %v435 = vpop.f32.mrb[0].mxu0
        %v436 = vadd.f32 %v326, %v435
        %v437 = vpop.f32.mrb[0].mxu0
        %v438 = vadd.f32 %v326, %v437
        %439 = vmatprep.mubr.f32.mxu0 0.0
        %440 = vmatmul.mubr.f32.gmra.mrb[0].mxu0 %v352
        %v441 = vpop.f32.mrb[0].mxu0
        %v442 = vadd.f32 %v331, %v441
        %v443 = vpop.f32.mrb[0].mxu0
        %v444 = vadd.f32 %v331, %v443
        %445 = vmatprep.mubr.f32.mxu0 0.0
        %446 = vmatmul.mubr.f32.gmra.mrb[0].mxu0 %v355
        %v447 = vpop.f32.mrb[0].mxu0
        %v448 = vadd.f32 %v336, %v447
        %v449 = vpop.f32.mrb[0].mxu0
        %v450 = vadd.f32 %v336, %v449
        %451 = vmatprep.mubr.f32.mxu0 0.0
        %452 = vmatmul.mubr.f32.gmra.mrb[0].mxu0 %v358
        %v453 = vpop.f32.mrb[0].mxu0
        %v454 = vadd.f32 %v341, %v453
        %v455 = vpop.f32.mrb[0].mxu0
        %v456 = vadd.f32 %v341, %v455
        %457 = vdwg.mxu0
        %458 = vmatprep.subr.mxu0 %v367
        %459 = vmatpush1.msra.mxu0 %v365
        %460 = vmatprep.subr.mxu0 0.0
        %461 = vmatpush1.msra.mxu0 0.0
        %462 = vmatprep.subr.mxu0 0.0
        %463 = vmatpush1.msra.mxu0 0.0
        %464 = vmatprep.subr.mxu0 0.0
        %465 = vmatpush1.msra.mxu0 0.0
        %466 = vmatprep.subr.mxu0 0.0
        %467 = vmatpush1.msra.mxu0 0.0
        %468 = vmatprep.subr.mxu0 0.0
        %469 = vmatpush1.msra.mxu0 0.0
        %470 = vmatprep.subr.mxu0 0.0
        %471 = vmatpush1.msra.mxu0 0.0
        %472 = vmatprep.subr.mxu0 0.0
        %473 = vmatpush1.msra.mxu0 0.0
        %474 = vmatprep.subr.mxu0 0.0
        %475 = vmatpush1.msra.mxu0 0.0
        %476 = vmatprep.subr.mxu0 0.0
        %477 = vmatpush1.msra.mxu0 0.0
        %478 = vmatprep.subr.mxu0 0.0
        %479 = vmatpush1.msra.mxu0 0.0
        %480 = vmatprep.subr.mxu0 0.0
        %481 = vmatpush1.msra.mxu0 0.0
        %482 = vmatprep.subr.mxu0 0.0
        %483 = vmatpush1.msra.mxu0 0.0
        %484 = vmatprep.subr.mxu0 0.0
        %485 = vmatpush1.msra.mxu0 0.0
        %486 = vmatprep.subr.mxu0 0.0
        %487 = vmatpush1.msra.mxu0 0.0
        %488 = vmatprep.subr.mxu0 0.0
        %489 = vmatpush1.msra.mxu0 0.0
        %490 = vmatprep.subr.mxu0 0.0
        %491 = vmatpush1.msra.mxu0 0.0
        %492 = vmatprep.subr.mxu0 0.0
        %493 = vmatpush1.msra.mxu0 0.0
        %494 = vmatprep.subr.mxu0 0.0
        %495 = vmatpush1.msra.mxu0 0.0
        %496 = vmatprep.subr.mxu0 0.0
        %497 = vmatpush1.msra.mxu0 0.0
        %498 = vmatprep.subr.mxu0 0.0
        %499 = vmatpush1.msra.mxu0 0.0
        %500 = vmatprep.subr.mxu0 0.0
        %501 = vmatpush1.msra.mxu0 0.0
        %502 = vmatprep.subr.mxu0 0.0
        %503 = vmatpush1.msra.mxu0 0.0
        %504 = vmatprep.subr.mxu0 0.0
        %505 = vmatpush1.msra.mxu0 0.0
        %506 = vmatprep.subr.mxu0 0.0
        %507 = vmatpush1.msra.mxu0 0.0
        %508 = vmatprep.subr.mxu0 0.0
        %509 = vmatpush1.msra.mxu0 0.0
        %510 = vmatprep.subr.mxu0 0.0
        %511 = vmatpush1.msra.mxu0 0.0
        %512 = vmatprep.subr.mxu0 0.0
        %513 = vmatpush1.msra.mxu0 0.0
        %514 = vmatprep.subr.mxu0 0.0
        %515 = vmatpush1.msra.mxu0 0.0
        %516 = vmatprep.subr.mxu0 0.0
        %517 = vmatpush1.msra.mxu0 0.0
        %518 = vmatprep.subr.mxu0 0.0
        %519 = vmatpush1.msra.mxu0 0.0
        %520 = vmatprep.subr.mxu0 0.0
        %521 = vmatpush1.msra.mxu0 0.0
        %522 = vmatprep.mubr.f32.mxu0 0.0
        %523 = vmatmul.mubr.f32.gmra.mrb[0].mxu0 %v349
        %v524 = vpop.f32.mrb[0].mxu0
        %v525 = vadd.f32 %v326, %v524
        %v526 = vpop.f32.mrb[0].mxu0
        %v527 = vadd.f32 %v326, %v526
        %528 = vmatprep.mubr.f32.mxu0 0.0
        %529 = vmatmul.mubr.f32.gmra.mrb[0].mxu0 %v352
        %v530 = vpop.f32.mrb[0].mxu0
        %v531 = vadd.f32 %v331, %v530
        %v532 = vpop.f32.mrb[0].mxu0
        %v533 = vadd.f32 %v331, %v532
        %534 = vmatprep.mubr.f32.mxu0 0.0
        %535 = vmatmul.mubr.f32.gmra.mrb[0].mxu0 %v355
        %v536 = vpop.f32.mrb[0].mxu0
        %v537 = vadd.f32 %v336, %v536
        %v538 = vpop.f32.mrb[0].mxu0
        %v539 = vadd.f32 %v336, %v538
        %540 = vmatprep.mubr.f32.mxu0 0.0
        %541 = vmatmul.mubr.f32.gmra.mrb[0].mxu0 %v358
        %v542 = vpop.f32.mrb[0].mxu0
        %v543 = vadd.f32 %v341, %v542
        %v544 = vpop.f32.mrb[0].mxu0
        %v545 = vadd.f32 %v341, %v544
        %546 = vdwg.mxu0
        %v547 = vmax.f32 %v436, 0.0
        %v548 = vmax.f32 %v438, 0.0
        %v549 = vmax.f32 %v525, 0.0
        %v550 = vmax.f32 %v527, 0.0
        %v551 = vmax.f32 %v442, 0.0
        %v552 = vmax.f32 %v444, 0.0
        %v553 = vmax.f32 %v531, 0.0
        %v554 = vmax.f32 %v533, 0.0
        %v555 = vmax.f32 %v448, 0.0
        %v556 = vmax.f32 %v450, 0.0
        %v557 = vmax.f32 %v537, 0.0
        %v558 = vmax.f32 %v539, 0.0
        %v559 = vmax.f32 %v454, 0.0
        %v560 = vmax.f32 %v456, 0.0
        %v561 = vmax.f32 %v543, 0.0
        %v562 = vmax.f32 %v545, 0.0
        %v563 = vld [vmem:[%s4] sm:$0xf]
        %v564 = vld [vmem:[%s5] sm:$0xf]
        %566 = vset.pattern.permute.xlu0 0
        %567 = vperm.xlu0 %566, %v564
        %v568 = vpop.permute.xlu0 %567
        %vm570 = vcmask 261120
        %v572 = vsel %vm570, %v563, 0
        %574 = vmatprep.subr.mxu0 %v548
        %575 = vmatpush1.msra.mxu0 %v547
        %576 = vmatprep.subr.mxu0 %v552
        %577 = vmatpush1.msra.mxu0 %v551
        %578 = vmatprep.subr.mxu0 %v556
        %579 = vmatpush1.msra.mxu0 %v555
        %580 = vmatprep.subr.mxu0 %v560
        %581 = vmatpush1.msra.mxu0 %v559
        %582 = vmatprep.subr.mxu0 0.0
        %583 = vmatpush1.msra.mxu0 0.0
        %584 = vmatprep.subr.mxu0 0.0
        %585 = vmatpush1.msra.mxu0 0.0
        %586 = vmatprep.subr.mxu0 0.0
        %587 = vmatpush1.msra.mxu0 0.0
        %588 = vmatprep.subr.mxu0 0.0
        %589 = vmatpush1.msra.mxu0 0.0
        %590 = vmatprep.subr.mxu0 0.0
        %591 = vmatpush1.msra.mxu0 0.0
        %592 = vmatprep.subr.mxu0 0.0
        %593 = vmatpush1.msra.mxu0 0.0
        %594 = vmatprep.subr.mxu0 0.0
        %595 = vmatpush1.msra.mxu0 0.0
        %596 = vmatprep.subr.mxu0 0.0
        %597 = vmatpush1.msra.mxu0 0.0
        %598 = vmatprep.subr.mxu0 0.0
        %599 = vmatpush1.msra.mxu0 0.0
        %600 = vmatprep.subr.mxu0 0.0
        %601 = vmatpush1.msra.mxu0 0.0
        %602 = vmatprep.subr.mxu0 0.0
        %603 = vmatpush1.msra.mxu0 0.0
        %604 = vmatprep.subr.mxu0 0.0
        %605 = vmatpush1.msra.mxu0 0.0
        %606 = vmatprep.subr.mxu0 0.0
        %607 = vmatpush1.msra.mxu0 0.0
        %608 = vmatprep.subr.mxu0 0.0
        %609 = vmatpush1.msra.mxu0 0.0
        %610 = vmatprep.subr.mxu0 0.0
        %611 = vmatpush1.msra.mxu0 0.0
        %612 = vmatprep.subr.mxu0 0.0
        %613 = vmatpush1.msra.mxu0 0.0
        %614 = vmatprep.subr.mxu0 0.0
        %615 = vmatpush1.msra.mxu0 0.0
        %616 = vmatprep.subr.mxu0 0.0
        %617 = vmatpush1.msra.mxu0 0.0
        %618 = vmatprep.subr.mxu0 0.0
        %619 = vmatpush1.msra.mxu0 0.0
        %620 = vmatprep.subr.mxu0 0.0
        %621 = vmatpush1.msra.mxu0 0.0
        %622 = vmatprep.subr.mxu0 0.0
        %623 = vmatpush1.msra.mxu0 0.0
        %624 = vmatprep.subr.mxu0 0.0
        %625 = vmatpush1.msra.mxu0 0.0
        %626 = vmatprep.subr.mxu0 0.0
        %627 = vmatpush1.msra.mxu0 0.0
        %628 = vmatprep.subr.mxu0 0.0
        %629 = vmatpush1.msra.mxu0 0.0
        %630 = vmatprep.subr.mxu0 0.0
        %631 = vmatpush1.msra.mxu0 0.0
        %632 = vmatprep.subr.mxu0 0.0
        %633 = vmatpush1.msra.mxu0 0.0
        %634 = vmatprep.subr.mxu0 0.0
        %635 = vmatpush1.msra.mxu0 0.0
        %636 = vmatprep.subr.mxu0 0.0
        %637 = vmatpush1.msra.mxu0 0.0
        %638 = vmatprep.mubr.f32.mxu0 0.0
        %639 = vmatmul.mubr.f32.gmra.mrb[0].mxu0 %v572
        %v640 = vpop.f32.mrb[0].mxu0
        %v641 = vadd.f32 %v568, %v640
        %v642 = vpop.f32.mrb[0].mxu0
        %v643 = vadd.f32 %v568, %v642
        %644 = vdwg.mxu0
        %645 = vmatprep.subr.mxu0 %v550
        %646 = vmatpush1.msra.mxu0 %v549
        %647 = vmatprep.subr.mxu0 %v554
        %648 = vmatpush1.msra.mxu0 %v553
        %649 = vmatprep.subr.mxu0 %v558
        %650 = vmatpush1.msra.mxu0 %v557
        %651 = vmatprep.subr.mxu0 %v562
        %652 = vmatpush1.msra.mxu0 %v561
        %653 = vmatprep.subr.mxu0 0.0
        %654 = vmatpush1.msra.mxu0 0.0
        %655 = vmatprep.subr.mxu0 0.0
        %656 = vmatpush1.msra.mxu0 0.0
        %657 = vmatprep.subr.mxu0 0.0
        %658 = vmatpush1.msra.mxu0 0.0
        %659 = vmatprep.subr.mxu0 0.0
        %660 = vmatpush1.msra.mxu0 0.0
        %661 = vmatprep.subr.mxu0 0.0
        %662 = vmatpush1.msra.mxu0 0.0
        %663 = vmatprep.subr.mxu0 0.0
        %664 = vmatpush1.msra.mxu0 0.0
        %665 = vmatprep.subr.mxu0 0.0
        %666 = vmatpush1.msra.mxu0 0.0
        %667 = vmatprep.subr.mxu0 0.0
        %668 = vmatpush1.msra.mxu0 0.0
        %669 = vmatprep.subr.mxu0 0.0
        %670 = vmatpush1.msra.mxu0 0.0
        %671 = vmatprep.subr.mxu0 0.0
        %672 = vmatpush1.msra.mxu0 0.0
        %673 = vmatprep.subr.mxu0 0.0
        %674 = vmatpush1.msra.mxu0 0.0
        %675 = vmatprep.subr.mxu0 0.0
        %676 = vmatpush1.msra.mxu0 0.0
        %677 = vmatprep.subr.mxu0 0.0
        %678 = vmatpush1.msra.mxu0 0.0
        %679 = vmatprep.subr.mxu0 0.0
        %680 = vmatpush1.msra.mxu0 0.0
        %681 = vmatprep.subr.mxu0 0.0
        %682 = vmatpush1.msra.mxu0 0.0
        %683 = vmatprep.subr.mxu0 0.0
        %684 = vmatpush1.msra.mxu0 0.0
        %685 = vmatprep.subr.mxu0 0.0
        %686 = vmatpush1.msra.mxu0 0.0
        %687 = vmatprep.subr.mxu0 0.0
        %688 = vmatpush1.msra.mxu0 0.0
        %689 = vmatprep.subr.mxu0 0.0
        %690 = vmatpush1.msra.mxu0 0.0
        %691 = vmatprep.subr.mxu0 0.0
        %692 = vmatpush1.msra.mxu0 0.0
        %693 = vmatprep.subr.mxu0 0.0
        %694 = vmatpush1.msra.mxu0 0.0
        %695 = vmatprep.subr.mxu0 0.0
        %696 = vmatpush1.msra.mxu0 0.0
        %697 = vmatprep.subr.mxu0 0.0
        %698 = vmatpush1.msra.mxu0 0.0
        %699 = vmatprep.subr.mxu0 0.0
        %700 = vmatpush1.msra.mxu0 0.0
        %701 = vmatprep.subr.mxu0 0.0
        %702 = vmatpush1.msra.mxu0 0.0
        %703 = vmatprep.subr.mxu0 0.0
        %704 = vmatpush1.msra.mxu0 0.0
        %705 = vmatprep.subr.mxu0 0.0
        %706 = vmatpush1.msra.mxu0 0.0
        %707 = vmatprep.subr.mxu0 0.0
        %708 = vmatpush1.msra.mxu0 0.0
        %709 = vmatprep.mubr.f32.mxu0 0.0
        %710 = vmatmul.mubr.f32.gmra.mrb[0].mxu0 %v572
        %v711 = vpop.f32.mrb[0].mxu0
        %v712 = vadd.f32 %v568, %v711
        %v713 = vpop.f32.mrb[0].mxu0
        %v714 = vadd.f32 %v568, %v713
        %715 = vdwg.mxu0
        %v716 = vld [vmem:[#allocation5] sm:$0xff]
        %v717 = vld [vmem:[#allocation5 + $0x8] sm:$0xff]
        %v722 = vcombine.low %v641, %v643
        %v723 = vcombine.low %v712, %v714
        %v726 = vadd.f32 %v716, %v722
        %v727 = vadd.f32 %v717, %v723
        %728 = vst [vmem:[#allocation5] sm:$0xff] %v726
        %729 = vst [vmem:[#allocation5 + $0x8] sm:$0xff] %v727
        %p730 = scmp.eq.s32.totalorder %s26, 4
        // Predicated region
        $region53: #{tpu_custom_call.1} parent=43 // pred_check
          %p731 = pneg %p730
        $region54: #{tpu_custom_call.1} parent=43 // pred_check_branch
          %733 = sbr.rel (%p731) target = $region56
        $region55: #{tpu_custom_call.1} parent=43 // pred_region
          %v734 = vld [vmem:[#allocation5] sm:$0xff]
          %v735 = vld [vmem:[#allocation5 + $0x8] sm:$0xff]
          %v736 = vmul.f32 %v734, 0.2
          %v737 = vmul.f32 %v735, 0.2
          %738 = vst [vmem:[#allocation5] sm:$0xff] %v736
          %739 = vst [vmem:[#allocation5 + $0x8] sm:$0xff] %v737
        $region56: #{tpu_custom_call.1} parent=43 // pred_fallthru
          _
        // Predicated region
        $region57: #{tpu_custom_call.1} parent=43 // pred_check
          %p740 = pneg %p189
        $region58: #{tpu_custom_call.1} parent=43 // pred_check_branch
          %742 = sbr.rel (%p740) target = $region60
        $region59: #{tpu_custom_call.1} parent=43 // pred_region
          %s743 = smul.u32 4, %s25
          %s745 = ssub.s32 256, 256
          %746 = vsyncadd [#allocation4], %s745
          %s747 = smul.addr %s743, 64
          %s748 = scalar_lea.hbm %s6, %s747
          %s750 = sshll.u32 [#allocation5], 4
          %s751 = int_to_ptr.vmem [resolvable:$true] %s750
          %753 = dma.vmem_to_hbm [thread:$0]  %s751, 256, %s748, [#allocation4]
        $region60: #{tpu_custom_call.1} parent=43 // pred_fallthru
          _
        // Predicated region
        $region61: #{tpu_custom_call.1} parent=43 // pred_check
          %p754 = pneg %p189
        $region62: #{tpu_custom_call.1} parent=43 // pred_check_branch
          %756 = sbr.rel (%p754) target = $region64
        $region63: #{tpu_custom_call.1} parent=43 // pred_region
          %757 = dma.done [#allocation4], 256
        $region64: #{tpu_custom_call.1} parent=43 // pred_fallthru
          _
      $region44: #{tpu_custom_call.1} parent=5 // pred_fallthru
        _
      %p758 = scmp.le.s32.totalorder 2, %s16
      // Predicated region
      $region65: #{tpu_custom_call.1} parent=5 // pred_check
        %p759 = pneg %p758
      $region66: #{tpu_custom_call.1} parent=5 // pred_check_branch
        %761 = sbr.rel (%p759) target = $region68
      $region67: #{tpu_custom_call.1} parent=5 // pred_region
        %s762 = ssub.s32 %s16, 2
      $region68: #{tpu_custom_call.1} parent=5 // pred_fallthru
        _
    $region6: #{tpu_custom_call.1} parent=1 // loop_footer
      %s20 = sadd.s32 1, %s16
    $region7: #{tpu_custom_call.1} parent=1 // loop_footer_branch
      %15 = sbr.rel target = $region3
    $region8: #{tpu_custom_call.1} parent=1 // loop_exit
      _
    %763 = vsyncpa [#allocation3], 1
    %s764 = scalar_lea.sflag [#allocation3], 1
    %765 = vsyncpa %s764, 1
    %766 = vsyncpa [#allocation4], 1
    %s767 = scalar_lea.sflag [#allocation4], 1
    %768 = vsyncpa %s767, 1

</llo_original>
